<compile_context>
chip_gen: v5e
topology: v5e:2x2
jax: 0.10.0
libtpu: 0.0.40
codegen_flags: <defaults>
</compile_context>

<pallas_src>
import functools

import jax
import jax.numpy as jnp
from jax.experimental import pallas as pl
from jax.experimental.pallas import tpu as pltpu

LRELU_SLOPE = 0.2
BN_EPS = 1e-5
# Safe across v5e/v6e/v7x (<= physical VMEM everywhere; raises v5e's 16 MiB scoped default).
VMEM_LIMIT = 32 * 1024 * 1024


def _ceil_to(v, m):
    return -(-v // m) * m


# ----------------------------- Conv2d kernel -----------------------------

def _conv_row_kernel(x_ref, w_ref, b_ref, o_ref, *, kh, kw, wo, act):
    """One output row (all Wo columns) x one Cout tile per grid step.

    x_ref: (1, Hp, Wp, Cin)  whole padded image (resident across the row / Cout axes)
    w_ref: (kh, kw, Cin, TC) weight taps (bf16)
    b_ref: (1, TC)           bias (f32)
    o_ref: (1, 1, Wo, TC)    one output row
    """
    ho = pl.program_id(2)
    tc = o_ref.shape[-1]
    acc = jnp.zeros((wo, tc), jnp.float32)
    for a in range(kh):
        for b in range(kw):
            lhs = x_ref[0, ho + a, pl.ds(b, wo), :]          # (Wo, Cin) bf16, unit stride
            acc = acc + jnp.dot(lhs, w_ref[a, b],
                                preferred_element_type=jnp.float32)
    y = acc + b_ref[...]                                     # f32 epilogue
    if act:
        y = jnp.where(y >= 0, y, LRELU_SLOPE * y)
    o_ref[0, 0] = y.astype(o_ref.dtype)


def conv2d_pallas(x, w, bias, *, stride, act, out_dtype=jnp.bfloat16):
    """Conv2d(kernel=4, padding=2, stride in {1, 2}) on NHWC bf16 activations.

    x: (N, H, W, Cin) bf16; w: (Cout, Cin, 4, 4) torch layout; bias: (Cout,).
    """
    N, H, W, Cin = x.shape
    Cout = w.shape[0]
    pad = 2

    if stride == 2:
        # Fold stride 2 into channels (space-to-depth): 4x4/s2 conv -> 2x2/s1 conv on 4*Cin.
        eh = (H + 2 * pad) % 2
        ew = (W + 2 * pad) % 2
        xp = jnp.pad(x, ((0, 0), (pad, pad + eh), (pad, pad + ew), (0, 0)))
        Hs, Ws = xp.shape[1] // 2, xp.shape[2] // 2
        xs = xp.reshape(N, Hs, 2, Ws, 2, Cin)
        xs = xs.transpose(0, 1, 3, 2, 4, 5).reshape(N, Hs, Ws, 4 * Cin)
        wt = jnp.transpose(w, (2, 3, 1, 0))                  # (ky, kx, Cin, Cout)
        wt = wt.reshape(2, 2, 2, 2, Cin, Cout)               # (a, py, b, px, Cin, Cout)
        wt = wt.transpose(0, 2, 1, 3, 4, 5).reshape(2, 2, 4 * Cin, Cout)
        kh = kw = 2
        Ho, Wo = H // 2 + 1, W // 2 + 1
    else:
        xs = jnp.pad(x, ((0, 0), (pad, pad), (pad, pad), (0, 0)))
        wt = jnp.transpose(w, (2, 3, 1, 0))                  # (4, 4, Cin, Cout)
        kh = kw = 4
        Ho, Wo = H + 1, W + 1

    HpX, WpX, CinX = xs.shape[1], xs.shape[2], xs.shape[3]
    xs = xs.astype(jnp.bfloat16)
    wt = wt.astype(jnp.bfloat16)
    b2 = bias.reshape(1, Cout).astype(jnp.float32)

    # Cout tiling: 256-wide tiles for the big layers (v6e/v7x MXU), exact width for small
    # Cout (no 128-lane zero padding written back to HBM for the Cout=1 / Cout=ndf layers).
    if Cout % 256 == 0:
        TC = 256
    elif Cout % 128 == 0:
        TC = 128
    else:
        TC = Cout
    NJ = Cout // TC

    kernel = functools.partial(_conv_row_kernel, kh=kh, kw=kw, wo=Wo, act=act)
    return pl.pallas_call(
        kernel,
        out_shape=jax.ShapeDtypeStruct((N, Ho, Wo, Cout), out_dtype),
        grid=(N, NJ, Ho),
        in_specs=[
            # whole padded image of sample n; index depends only on n -> fetched once per n
            pl.BlockSpec((1, HpX, WpX, CinX), lambda n, j, h: (n, 0, 0, 0)),
            pl.BlockSpec((kh, kw, CinX, TC), lambda n, j, h: (0, 0, 0, j)),
            pl.BlockSpec((1, TC), lambda n, j, h: (0, j)),
        ],
        out_specs=pl.BlockSpec((1, 1, Wo, TC), lambda n, j, h: (n, h, 0, j)),
        compiler_params=pltpu.CompilerParams(
            dimension_semantics=("parallel", "parallel", "parallel"),
            vmem_limit_bytes=VMEM_LIMIT),
    )(xs, wt, b2)


# ----------------------- BatchNorm (train) + LeakyReLU -----------------------

def _bn_stats_kernel(x_ref, g_ref, bt_ref, stats_ref, *, m_total):
    """Pass 1: reduce per-channel sum / sum-of-squares across all row tiles, then fold
    gamma/beta/eps into a (scale, shift) pair on the last step (resident (2, C) output)."""
    i = pl.program_id(0)

    @pl.when(i == 0)
    def _():
        stats_ref[...] = jnp.zeros_like(stats_ref)

    tmb = x_ref.shape[0]
    x = x_ref[...].astype(jnp.float32)
    rows = jax.lax.broadcasted_iota(jnp.int32, (tmb, 1), 0) + i * tmb
    xm = jnp.where(rows < m_total, x, 0.0)                  # mask the ragged tail rows
    stats_ref[0:1, :] += jnp.sum(xm, axis=0, keepdims=True)
    stats_ref[1:2, :] += jnp.sum(xm * xm, axis=0, keepdims=True)

    @pl.when(i == pl.num_programs(0) - 1)
    def _():
        inv_m = 1.0 / m_total
        mean = stats_ref[0:1, :] * inv_m
        # Single-pass E[x^2] - mean^2 with f32 accumulation, clamped at 0 for safety.
        var = jnp.maximum(stats_ref[1:2, :] * inv_m - mean * mean, 0.0)
        scale = g_ref[...] * jax.lax.rsqrt(var + BN_EPS)
        stats_ref[0:1, :] = scale
        stats_ref[1:2, :] = bt_ref[...] - mean * scale


def _bn_apply_kernel(x_ref, stats_ref, o_ref):
    """Pass 2: y = x * scale + shift, then LeakyReLU(0.2); f32 math, bf16 store."""
    x = x_ref[...].astype(jnp.float32)
    y = x * stats_ref[0:1, :] + stats_ref[1:2, :]
    y = jnp.where(y >= 0, y, LRELU_SLOPE * y)
    o_ref[...] = y.astype(o_ref.dtype)


def bn_lrelu_pallas(x, gamma, beta, block_rows=2048):
    """Training-mode BatchNorm2d (batch statistics, biased var, eps=1e-5) + LeakyReLU(0.2)."""
    N, H, W, C = x.shape
    M = N * H * W
    x2 = x.reshape(M, C)                                    # free reshape (row-major)
    TMB = min(block_rows, _ceil_to(M, 8))
    Gm = pl.cdiv(M, TMB)
    g2 = gamma.reshape(1, C).astype(jnp.float32)
    bt2 = beta.reshape(1, C).astype(jnp.float32)

    stats = pl.pallas_call(
        functools.partial(_bn_stats_kernel, m_total=M),
        out_shape=jax.ShapeDtypeStruct((2, C), jnp.float32),
        grid=(Gm,),
        in_specs=[
            pl.BlockSpec((TMB, C), lambda i: (i, 0)),
            pl.BlockSpec((1, C), lambda i: (0, 0)),
            pl.BlockSpec((1, C), lambda i: (0, 0)),
        ],
        out_specs=pl.BlockSpec((2, C), lambda i: (0, 0)),
        compiler_params=pltpu.CompilerParams(
            dimension_semantics=("arbitrary",),
            vmem_limit_bytes=VMEM_LIMIT),
    )(x2, g2, bt2)

    y2 = pl.pallas_call(
        _bn_apply_kernel,
        out_shape=jax.ShapeDtypeStruct((M, C), x.dtype),
        grid=(Gm,),
        in_specs=[
            pl.BlockSpec((TMB, C), lambda i: (i, 0)),
            pl.BlockSpec((2, C), lambda i: (0, 0)),
        ],
        out_specs=pl.BlockSpec((TMB, C), lambda i: (i, 0)),
        compiler_params=pltpu.CompilerParams(
            dimension_semantics=("parallel",),
            vmem_limit_bytes=VMEM_LIMIT),
    )(x2, stats)
    return y2.reshape(N, H, W, C)


# --------------- AvgPool2d(3, stride=2, padding=1, count_include_pad=False) ---------------

def _pool_row_kernel(ph_ref, inv_ref, o_ref, *, wo):
    """One pooled output row per grid step.

    ph_ref : (4, Hs, Ws, C)  the 4 stride-phases of the padded image for one sample
    inv_ref: (Ho, Wo, 1)     1 / (# valid taps) per output position
    o_ref  : (1, 1, Wo, C)
    """
    ho = pl.program_id(1)
    c = o_ref.shape[-1]
    acc = jnp.zeros((wo, c), jnp.float32)
    for dy in range(3):
        for dx in range(3):
            p = (dy % 2) * 2 + (dx % 2)
            acc = acc + ph_ref[p, ho + dy // 2,
                               pl.ds(dx // 2, wo), :].astype(jnp.float32)
    o_ref[0, 0] = (acc * inv_ref[ho]).astype(o_ref.dtype)


def avgpool3x3_s2_pallas(x):
    N, H, W, C = x.shape
    Ho = (H - 1) // 2 + 1
    Wo = (W - 1) // 2 + 1
    eh = (H + 2) % 2
    ew = (W + 2) % 2
    xp = jnp.pad(x, ((0, 0), (1, 1 + eh), (1, 1 + ew), (0, 0)))
    Hs, Ws = xp.shape[1] // 2, xp.shape[2] // 2
    # 4 stride-phases (space-to-depth style) so the kernel only does unit-stride tap reads.
    ph = jnp.stack([xp[:, py::2, px::2, :] for py in (0, 1) for px in (0, 1)], axis=1)
    ph = ph.reshape(N * 4, Hs, Ws, C)

    def counts(n_out, size):
        idx = 2 * jnp.arange(n_out)[:, None] - 1 + jnp.arange(3)[None, :]
        return jnp.sum((idx >= 0) & (idx < size), axis=1).astype(jnp.float32)

    inv = 1.0 / (counts(Ho, H)[:, None] * counts(Wo, W)[None, :])
    inv = inv.reshape(Ho, Wo, 1)

    return pl.pallas_call(
        functools.partial(_pool_row_kernel, wo=Wo),
        out_shape=jax.ShapeDtypeStruct((N, Ho, Wo, C), x.dtype),
        grid=(N, Ho),
        in_specs=[
            pl.BlockSpec((4, Hs, Ws, C), lambda n, h: (n, 0, 0, 0)),
            pl.BlockSpec((Ho, Wo, 1), lambda n, h: (0, 0, 0)),
        ],
        out_specs=pl.BlockSpec((1, 1, Wo, C), lambda n, h: (n, h, 0, 0)),
        compiler_params=pltpu.CompilerParams(
            dimension_semantics=("parallel", "parallel"),
            vmem_limit_bytes=VMEM_LIMIT),
    )(ph, inv)


# ----------------------------- model params / forward -----------------------------

def init_nlayer_params(key, input_nc, ndf, n_layers):
    """Replicates NLayerDiscriminator.__init__ structure (kw=4, padw=2)."""
    specs = [dict(cin=input_nc, cout=ndf, stride=2, bn=False, act=True)]
    nf = ndf
    for _ in range(1, n_layers):
        nf_prev, nf = nf, min(nf * 2, 512)
        specs.append(dict(cin=nf_prev, cout=nf, stride=2, bn=True, act=True))
    nf_prev, nf = nf, min(nf * 2, 512)
    specs.append(dict(cin=nf_prev, cout=nf, stride=1, bn=True, act=True))
    specs.append(dict(cin=nf, cout=1, stride=1, bn=False, act=False))

    layers = []
    for s in specs:
        key, kw_, kb_, kg_, kbt_ = jax.random.split(key, 5)
        w = 0.05 * jax.random.normal(kw_, (s['cout'], s['cin'], 4, 4), jnp.float32)
        b = 0.02 * jax.random.normal(kb_, (s['cout'],), jnp.float32)
        gamma = beta = None
        if s['bn']:
            gamma = 1.0 + 0.1 * jax.random.normal(kg_, (s['cout'],), jnp.float32)
            beta = 0.1 * jax.random.normal(kbt_, (s['cout'],), jnp.float32)
        layers.append(dict(w=w, b=b, gamma=gamma, beta=beta,
                           stride=s['stride'], act=s['act']))
    return layers


def nlayer_forward(layers, x):
    h = x
    last = len(layers) - 1
    for li, lp in enumerate(layers):
        # Keep intermediate activations in bf16; final per-scale logits in f32.
        out_dtype = jnp.float32 if li == last else jnp.bfloat16
        # LeakyReLU fuses into the conv epilogue only when there is no norm layer;
        # otherwise it is applied by the fused BatchNorm-apply pass.
        h = conv2d_pallas(h, lp['w'], lp['b'], stride=lp['stride'],
                          act=(lp['act'] and lp['gamma'] is None),
                          out_dtype=out_dtype)
        if lp['gamma'] is not None:
            h = bn_lrelu_pallas(h, lp['gamma'], lp['beta'])
    return h


def multiscale_discriminator_forward(all_params, x_nchw):
    """Matches MultiscaleDiscriminator.forward with getIntermFeat=False."""
    num_D = len(all_params)
    x = jnp.transpose(x_nchw, (0, 2, 3, 1)).astype(jnp.bfloat16)   # NCHW -> NHWC bf16
    result = []
    xd = x
    for i in range(num_D):
        layers = all_params[num_D - 1 - i]
        out = nlayer_forward(layers, xd)                    # (N, Ho, Wo, 1) f32
        result.append([jnp.transpose(out, (0, 3, 1, 2))])   # back to NCHW
        if i != num_D - 1:
            xd = avgpool3x3_s2_pallas(xd)
    return result


# ----------------------------- main -----------------------------

if __name__ == "__main__":
    key = jax.random.PRNGKey(0)
    k_x, k_p = jax.random.split(key)

    input_nc, ndf, n_layers, num_D = 3, 8, 3, 3         # small but structurally faithful
    N, H, W = 2, 32, 32
    x = jax.random.normal(k_x, (N, input_nc, H, W), jnp.float32)

    d_keys = jax.random.split(k_p, num_D)
    all_params = [init_nlayer_params(d_keys[i], input_nc, ndf, n_layers)
                  for i in range(num_D)]

    result = multiscale_discriminator_forward(all_params, x)
    for scale_out in result:
        for t in scale_out:
            jax.block_until_ready(t)

    print("KERNEL_OK")
</pallas_src>

<mosaic_0001>
module attributes {stable_mosaic.version = 11 : i64} {
  func.func @_conv_row_kernel(%arg0: i32, %arg1: i32, %arg2: i32, %arg3: memref<1x18x18x12xbf16, #tpu.memory_space<vmem>>, %arg4: memref<2x2x12x8xbf16, #tpu.memory_space<vmem>>, %arg5: memref<1x8xf32, #tpu.memory_space<vmem>>, %arg6: memref<1x1x17x8xbf16, #tpu.memory_space<vmem>>) attributes {dimension_semantics = [#tpu.dimension_semantics<parallel>, #tpu.dimension_semantics<parallel>, #tpu.dimension_semantics<parallel>], iteration_bounds = array<i64: 2, 1, 17>, scalar_prefetch = 0 : i64, scratch_operands = 0 : i64, tpu.core_type = #tpu.core_type<tc>, window_params = [{transform_indices = @transform_0, window_bounds = array<i64: 1, 18, 18, 12>}, {transform_indices = @transform_1, window_bounds = array<i64: 2, 2, 12, 8>}, {transform_indices = @transform_2, window_bounds = array<i64: 1, 8>}, {transform_indices = @transform_3, window_bounds = array<i64: 1, 1, 17, 8>}]} {
    %cst = arith.constant 0.000000e+00 : f32
    %0 = vector.broadcast %cst : f32 to vector<17x8xf32>
    %c0_i32 = arith.constant 0 : i32
    %1 = arith.addi %arg2, %c0_i32 : i32
    %c0 = arith.constant 0 : index
    %2 = arith.index_cast %1 : i32 to index
    %c0_0 = arith.constant 0 : index
    %c0_1 = arith.constant 0 : index
    %3 = vector.load %arg3[%c0, %2, %c0_0, %c0_1] : memref<1x18x18x12xbf16, #tpu.memory_space<vmem>>, vector<1x1x17x12xbf16>
    %4 = vector.shape_cast %3 : vector<1x1x17x12xbf16> to vector<17x12xbf16>
    %c0_2 = arith.constant 0 : index
    %c0_3 = arith.constant 0 : index
    %c0_4 = arith.constant 0 : index
    %c0_5 = arith.constant 0 : index
    %5 = vector.load %arg4[%c0_2, %c0_3, %c0_4, %c0_5] : memref<2x2x12x8xbf16, #tpu.memory_space<vmem>>, vector<1x1x12x8xbf16>
    %6 = vector.shape_cast %5 : vector<1x1x12x8xbf16> to vector<12x8xbf16>
    %cst_6 = arith.constant dense<0.000000e+00> : vector<17x8xf32>
    %7 = tpu.matmul %4, %6, %cst_6 {dimension_numbers = #tpu.dot_dimension_numbers<[1], [0], [0], [1], [0, 0, 1, 1], [], []>} : vector<17x12xbf16>, vector<12x8xbf16>, vector<17x8xf32> -> vector<17x8xf32>
    %8 = arith.addf %0, %7 : vector<17x8xf32>
    %c0_i32_7 = arith.constant 0 : i32
    %9 = arith.addi %arg2, %c0_i32_7 : i32
    %c0_8 = arith.constant 0 : index
    %10 = arith.index_cast %9 : i32 to index
    %c1 = arith.constant 1 : index
    %c0_9 = arith.constant 0 : index
    %11 = vector.load %arg3[%c0_8, %10, %c1, %c0_9] : memref<1x18x18x12xbf16, #tpu.memory_space<vmem>>, vector<1x1x17x12xbf16>
    %12 = vector.shape_cast %11 : vector<1x1x17x12xbf16> to vector<17x12xbf16>
    %c0_10 = arith.constant 0 : index
    %c1_11 = arith.constant 1 : index
    %c0_12 = arith.constant 0 : index
    %c0_13 = arith.constant 0 : index
    %13 = vector.load %arg4[%c0_10, %c1_11, %c0_12, %c0_13] : memref<2x2x12x8xbf16, #tpu.memory_space<vmem>>, vector<1x1x12x8xbf16>
    %14 = vector.shape_cast %13 : vector<1x1x12x8xbf16> to vector<12x8xbf16>
    %cst_14 = arith.constant dense<0.000000e+00> : vector<17x8xf32>
    %15 = tpu.matmul %12, %14, %cst_14 {dimension_numbers = #tpu.dot_dimension_numbers<[1], [0], [0], [1], [0, 0, 1, 1], [], []>} : vector<17x12xbf16>, vector<12x8xbf16>, vector<17x8xf32> -> vector<17x8xf32>
    %16 = arith.addf %8, %15 : vector<17x8xf32>
    %c1_i32 = arith.constant 1 : i32
    %17 = arith.addi %arg2, %c1_i32 : i32
    %c0_15 = arith.constant 0 : index
    %18 = arith.index_cast %17 : i32 to index
    %c0_16 = arith.constant 0 : index
    %c0_17 = arith.constant 0 : index
    %19 = vector.load %arg3[%c0_15, %18, %c0_16, %c0_17] : memref<1x18x18x12xbf16, #tpu.memory_space<vmem>>, vector<1x1x17x12xbf16>
    %20 = vector.shape_cast %19 : vector<1x1x17x12xbf16> to vector<17x12xbf16>
    %c1_18 = arith.constant 1 : index
    %c0_19 = arith.constant 0 : index
    %c0_20 = arith.constant 0 : index
    %c0_21 = arith.constant 0 : index
    %21 = vector.load %arg4[%c1_18, %c0_19, %c0_20, %c0_21] : memref<2x2x12x8xbf16, #tpu.memory_space<vmem>>, vector<1x1x12x8xbf16>
    %22 = vector.shape_cast %21 : vector<1x1x12x8xbf16> to vector<12x8xbf16>
    %cst_22 = arith.constant dense<0.000000e+00> : vector<17x8xf32>
    %23 = tpu.matmul %20, %22, %cst_22 {dimension_numbers = #tpu.dot_dimension_numbers<[1], [0], [0], [1], [0, 0, 1, 1], [], []>} : vector<17x12xbf16>, vector<12x8xbf16>, vector<17x8xf32> -> vector<17x8xf32>
    %24 = arith.addf %16, %23 : vector<17x8xf32>
    %c1_i32_23 = arith.constant 1 : i32
    %25 = arith.addi %arg2, %c1_i32_23 : i32
    %c0_24 = arith.constant 0 : index
    %26 = arith.index_cast %25 : i32 to index
    %c1_25 = arith.constant 1 : index
    %c0_26 = arith.constant 0 : index
    %27 = vector.load %arg3[%c0_24, %26, %c1_25, %c0_26] : memref<1x18x18x12xbf16, #tpu.memory_space<vmem>>, vector<1x1x17x12xbf16>
    %28 = vector.shape_cast %27 : vector<1x1x17x12xbf16> to vector<17x12xbf16>
    %c1_27 = arith.constant 1 : index
    %c1_28 = arith.constant 1 : index
    %c0_29 = arith.constant 0 : index
    %c0_30 = arith.constant 0 : index
    %29 = vector.load %arg4[%c1_27, %c1_28, %c0_29, %c0_30] : memref<2x2x12x8xbf16, #tpu.memory_space<vmem>>, vector<1x1x12x8xbf16>
    %30 = vector.shape_cast %29 : vector<1x1x12x8xbf16> to vector<12x8xbf16>
    %cst_31 = arith.constant dense<0.000000e+00> : vector<17x8xf32>
    %31 = tpu.matmul %28, %30, %cst_31 {dimension_numbers = #tpu.dot_dimension_numbers<[1], [0], [0], [1], [0, 0, 1, 1], [], []>} : vector<17x12xbf16>, vector<12x8xbf16>, vector<17x8xf32> -> vector<17x8xf32>
    %32 = arith.addf %24, %31 : vector<17x8xf32>
    %c0_32 = arith.constant 0 : index
    %c0_33 = arith.constant 0 : index
    %33 = vector.load %arg5[%c0_32, %c0_33] : memref<1x8xf32, #tpu.memory_space<vmem>>, vector<1x8xf32>
    %34 = vector.broadcast %33 : vector<1x8xf32> to vector<17x8xf32>
    %35 = arith.addf %32, %34 : vector<17x8xf32>
    %cst_34 = arith.constant 0.000000e+00 : f32
    %36 = vector.broadcast %cst_34 : f32 to vector<17x8xf32>
    %37 = arith.cmpf oge, %35, %36 : vector<17x8xf32>
    %cst_35 = arith.constant 2.000000e-01 : f32
    %38 = vector.broadcast %cst_35 : f32 to vector<17x8xf32>
    %39 = arith.mulf %38, %35 : vector<17x8xf32>
    %40 = arith.select %37, %35, %39 : vector<17x8xi1>, vector<17x8xf32>
    %41 = arith.truncf %40 : vector<17x8xf32> to vector<17x8xbf16>
    %c0_36 = arith.constant 0 : index
    %c0_37 = arith.constant 0 : index
    %c0_38 = arith.constant 0 : index
    %c0_39 = arith.constant 0 : index
    %42 = vector.load %arg6[%c0_36, %c0_37, %c0_38, %c0_39] : memref<1x1x17x8xbf16, #tpu.memory_space<vmem>>, vector<1x1x17x8xbf16>
    %43 = vector.shape_cast %42 : vector<1x1x17x8xbf16> to vector<17x8xbf16>
    %44 = vector.shape_cast %41 : vector<17x8xbf16> to vector<1x1x17x8xbf16>
    tpu.vector_store %arg6[%c0_36, %c0_37, %c0_38, %c0_39], %44 {strides = array<i32>} : memref<1x1x17x8xbf16, #tpu.memory_space<vmem>>, vector<1x1x17x8xbf16>,
    return
  }
  func.func @transform_0(%arg0: i32, %arg1: i32, %arg2: i32) -> (i32, i32, i32, i32) {
    %c0_i32 = arith.constant 0 : i32
    %c0_i32_0 = arith.constant 0 : i32
    %c0_i32_1 = arith.constant 0 : i32
    %c0_i32_2 = arith.constant 0 : i32
    return %arg0, %c0_i32, %c0_i32_0, %c0_i32_1 : i32, i32, i32, i32
  }
  func.func @transform_1(%arg0: i32, %arg1: i32, %arg2: i32) -> (i32, i32, i32, i32) {
    %c0_i32 = arith.constant 0 : i32
    %c0_i32_0 = arith.constant 0 : i32
    %c0_i32_1 = arith.constant 0 : i32
    %c0_i32_2 = arith.constant 0 : i32
    return %c0_i32, %c0_i32_0, %c0_i32_1, %arg1 : i32, i32, i32, i32
  }
  func.func @transform_2(%arg0: i32, %arg1: i32, %arg2: i32) -> (i32, i32) {
    %c0_i32 = arith.constant 0 : i32
    %c0_i32_0 = arith.constant 0 : i32
    return %c0_i32, %arg1 : i32, i32
  }
  func.func @transform_3(%arg0: i32, %arg1: i32, %arg2: i32) -> (i32, i32, i32, i32) {
    %c0_i32 = arith.constant 0 : i32
    %c0_i32_0 = arith.constant 0 : i32
    return %arg0, %arg2, %c0_i32, %arg1 : i32, i32, i32, i32
  }
}

</mosaic_0001>

<llo_original>
// kernel: tpu_custom_call.1
$region0: #{tpu_custom_call.1}
  #allocation0 [shape = 'u32[]', space=smem, size = 0x4, offset = 0x4, fixed_abs, tag = 'smem constant byte address 0x4 - core index']
  #allocation1 [shape = 'u32[72,128]{1,0:T(1,128)}', space=vmem, size = 0x9000, scoped, tag = 'internal scratch']
  %s0 = inlined_call_operand.vmem [shape: bf16[2,18,18,12], index: 0, kind: input, shape index: {}]
  %s1 = inlined_call_operand.vmem [shape: bf16[2,2,12,8], index: 1, kind: input, shape index: {}]
  %s2 = inlined_call_operand.vmem [shape: f32[1,8], index: 2, kind: input, shape index: {}]
  %s3 = inlined_call_operand.vmem [shape: bf16[2,17,17,8], index: 3, kind: output, shape index: {}]
  %s4 = sld [smem:[#allocation0]]
  $region45: #{tpu_custom_call.1} parent=0
    _
  %s6 = ssub.s32 1, %s4
  %s7 = scalar_select 0, %s6, %s4
  loop: start=0, step=1, limit=36
  $region2: #{tpu_custom_call.1} parent=0 // loop_pre_header
    _
  $region3: #{tpu_custom_call.1} parent=0 // loop_header
    %s9 = sphi 0, %s13
    %p10 = scmp.ge.s32.totalorder %s9, 36
    %s16 = sphi 0, %s35
    %s17 = sphi 0, %s31
    %s18 = sphi 0, %s27
    %s19 = sphi 0, %s16
    %s20 = sphi 0, %s17
    %s21 = sphi 0, %s18
    %s22 = sphi 0, %s19
    %s23 = sphi 0, %s20
    %s24 = sphi 0, %s21
    %s38 = sphi 0, %s40
    %s41 = sphi 0, %s38
    %s42 = sphi 0, %s41
    %s58 = sphi 0, %s42
    %s64 = sphi 0, %s66
    %s67 = sphi 0, %s64
    %s68 = sphi 0, %s67
    %s84 = sphi 0, %s68
    %s90 = sphi 0, %s92
    %s93 = sphi 0, %s90
    %s94 = sphi 0, %s93
    %s110 = sphi 0, %s94
    %s120 = sphi 0, %s122
    %s123 = sphi 0, %s120
    %s124 = sphi 0, %s123
    %s140 = sphi 0, %s124
  $region4: #{tpu_custom_call.1} parent=0 // loop_header_branch
    %12 = sbr.rel (%p10) target = $region8
  $region5: #{tpu_custom_call.1} parent=0 // loop_body
    %s14 = ssub.s32 %s9, 1
    %s15 = ssub.s32 %s9, 2
    %s25 = sadd.s32 1, %s18
    %p26 = scmp.ge.s32.totalorder %s25, 17
    %s27 = scalar_select %p26, 0, %s25
    %s28 = sadd.s32 1, %s17
    %s29 = scalar_select %p26, %s28, %s17
    %p30 = scmp.ge.s32.totalorder %s29, 1
    %s31 = scalar_select %p30, 0, %s29
    %s32 = sadd.s32 1, %s16
    %s33 = scalar_select %p30, %s32, %s16
    %p34 = scmp.ge.s32.totalorder %s33, 2
    %s35 = scalar_select %p34, 0, %s33
    %s36 = ssub.s32 %s16, %s35
    %p37 = scmp.eq.s32.totalorder %s36, 0
    %s39 = sadd.s32 %s38, 1
    %s40 = scalar_select %p37, %s38, %s39
    %p43 = pneg %p37
    %p44 = scmp.eq.s32.totalorder %s9, 33
    %p45 = por %p43, %p44
    %p46 = scmp.ne.s32.totalorder %s38, %s41
    %p47 = scmp.eq.s32.totalorder %s9, 0
    %p48 = por %p46, %p47
    %p49 = scmp.ne.s32.totalorder %s38, %s41
    %p50 = scmp.eq.s32.totalorder %s14, 33
    %p51 = por %p49, %p50
    %p52 = scmp.ne.s32.totalorder %s41, %s42
    %p53 = scmp.eq.s32.totalorder %s14, 0
    %p54 = por %p52, %p53
    %p55 = scmp.ne.s32.totalorder %s41, %s42
    %p56 = scmp.eq.s32.totalorder %s15, 33
    %p57 = por %p55, %p56
    %p59 = scmp.ne.s32.totalorder %s42, %s58
    %p60 = scmp.eq.s32.totalorder %s15, 0
    %p61 = por %p59, %p60
    %s62 = ssub.s32 %s17, %s31
    %p63 = scmp.eq.s32.totalorder %s62, 0
    %s65 = sadd.s32 %s64, 1
    %s66 = scalar_select %p63, %s64, %s65
    %p69 = pneg %p63
    %p70 = scmp.eq.s32.totalorder %s9, 33
    %p71 = por %p69, %p70
    %p72 = scmp.ne.s32.totalorder %s64, %s67
    %p73 = scmp.eq.s32.totalorder %s9, 0
    %p74 = por %p72, %p73
    %p75 = scmp.ne.s32.totalorder %s64, %s67
    %p76 = scmp.eq.s32.totalorder %s14, 33
    %p77 = por %p75, %p76
    %p78 = scmp.ne.s32.totalorder %s67, %s68
    %p79 = scmp.eq.s32.totalorder %s14, 0
    %p80 = por %p78, %p79
    %p81 = scmp.ne.s32.totalorder %s67, %s68
    %p82 = scmp.eq.s32.totalorder %s15, 33
    %p83 = por %p81, %p82
    %p85 = scmp.ne.s32.totalorder %s68, %s84
    %p86 = scmp.eq.s32.totalorder %s15, 0
    %p87 = por %p85, %p86
    %s88 = ssub.s32 %s17, %s31
    %p89 = scmp.eq.s32.totalorder %s88, 0
    %s91 = sadd.s32 %s90, 1
    %s92 = scalar_select %p89, %s90, %s91
    %p95 = pneg %p89
    %p96 = scmp.eq.s32.totalorder %s9, 33
    %p97 = por %p95, %p96
    %p98 = scmp.ne.s32.totalorder %s90, %s93
    %p99 = scmp.eq.s32.totalorder %s9, 0
    %p100 = por %p98, %p99
    %p101 = scmp.ne.s32.totalorder %s90, %s93
    %p102 = scmp.eq.s32.totalorder %s14, 33
    %p103 = por %p101, %p102
    %p104 = scmp.ne.s32.totalorder %s93, %s94
    %p105 = scmp.eq.s32.totalorder %s14, 0
    %p106 = por %p104, %p105
    %p107 = scmp.ne.s32.totalorder %s93, %s94
    %p108 = scmp.eq.s32.totalorder %s15, 33
    %p109 = por %p107, %p108
    %p111 = scmp.ne.s32.totalorder %s94, %s110
    %p112 = scmp.eq.s32.totalorder %s15, 0
    %p113 = por %p111, %p112
    %s114 = ssub.s32 %s16, %s35
    %s115 = ssub.s32 %s18, %s27
    %s116 = sor.u32 %s114, %s115
    %s117 = ssub.s32 %s17, %s31
    %s118 = sor.u32 %s116, %s117
    %p119 = scmp.eq.s32.totalorder %s118, 0
    %s121 = sadd.s32 %s120, 1
    %s122 = scalar_select %p119, %s120, %s121
    %p125 = pneg %p119
    %p126 = scmp.eq.s32.totalorder %s9, 33
    %p127 = por %p125, %p126
    %p128 = scmp.ne.s32.totalorder %s120, %s123
    %p129 = scmp.eq.s32.totalorder %s9, 0
    %p130 = por %p128, %p129
    %p131 = scmp.ne.s32.totalorder %s120, %s123
    %p132 = scmp.eq.s32.totalorder %s14, 33
    %p133 = por %p131, %p132
    %p134 = scmp.ne.s32.totalorder %s123, %s124
    %p135 = scmp.eq.s32.totalorder %s14, 0
    %p136 = por %p134, %p135
    %p137 = scmp.ne.s32.totalorder %s123, %s124
    %p138 = scmp.eq.s32.totalorder %s15, 33
    %p139 = por %p137, %p138
    %p141 = scmp.ne.s32.totalorder %s124, %s140
    %p142 = scmp.eq.s32.totalorder %s15, 0
    %p143 = por %p141, %p142
    %p144 = scmp.le.s32.totalorder 1, %s9
    %p145 = scmp.lt.s32.totalorder %s9, 35
    %p146 = pnand %p144, %p145
    %p147 = pneg %p146
    // Predicated region
    $region9: #{tpu_custom_call.1} parent=5 // pred_check
      _
    $region10: #{tpu_custom_call.1} parent=5 // pred_check_branch
      %149 = sbr.rel (%p146) target = $region12
    $region11: #{tpu_custom_call.1} parent=5 // pred_region
      %s150 = ssub.s32 %s9, 1
      // Predicated region
      $region13: #{tpu_custom_call.1} parent=11 // pred_check
        %p151 = pneg %p80
      $region14: #{tpu_custom_call.1} parent=11 // pred_check_branch
        %153 = sbr.rel (%p151) target = $region16
      $region15: #{tpu_custom_call.1} parent=11 // pred_region
        %p154 = scmp.lt.s32.totalorder %s20, 0
        %s155 = scalar_select %p154, %s20, 0
        %s156 = smul.addr %s155, 4
        %s157 = scalar_lea.vmem %s1, %s156
      $region16: #{tpu_custom_call.1} parent=11 // pred_fallthru
        _
      // Predicated region
      $region17: #{tpu_custom_call.1} parent=11 // pred_check
        %p158 = pneg %p106
      $region18: #{tpu_custom_call.1} parent=11 // pred_check_branch
        %160 = sbr.rel (%p158) target = $region20
      $region19: #{tpu_custom_call.1} parent=11 // pred_region
        %p161 = scmp.lt.s32.totalorder %s20, 0
        %s162 = scalar_select %p161, %s20, 0
        %s163 = scalar_lea.vmem %s2, %s162
      $region20: #{tpu_custom_call.1} parent=11 // pred_fallthru
        _
    $region12: #{tpu_custom_call.1} parent=5 // pred_fallthru
      _
    %p164 = scmp.lt.s32.totalorder %s9, 34
    // Predicated region
    $region21: #{tpu_custom_call.1} parent=5 // pred_check
      %p165 = pneg %p164
    $region22: #{tpu_custom_call.1} parent=5 // pred_check_branch
      %167 = sbr.rel (%p165) target = $region24
    $region23: #{tpu_custom_call.1} parent=5 // pred_region
      // Predicated region
      $region25: #{tpu_custom_call.1} parent=23 // pred_check
        %p168 = pneg %p48
      $region26: #{tpu_custom_call.1} parent=23 // pred_check_branch
        %170 = sbr.rel (%p168) target = $region28
      $region27: #{tpu_custom_call.1} parent=23 // pred_region
        %p171 = scmp.lt.s32.totalorder %s16, 1
        %s172 = scalar_select %p171, %s16, 1
        %s173 = smul.addr %s172, 54
        %s174 = smul.addr %s173, 4
        %s175 = scalar_lea.vmem %s0, %s174
      $region28: #{tpu_custom_call.1} parent=23 // pred_fallthru
        _
    $region24: #{tpu_custom_call.1} parent=5 // pred_fallthru
      _
    %p176 = scmp.le.s32.totalorder 1, %s9
    %p177 = scmp.lt.s32.totalorder %s9, 35
    %p178 = pnand %p176, %p177
    %p179 = pneg %p178
    // Predicated region
    $region29: #{tpu_custom_call.1} parent=5 // pred_check
      _
    $region30: #{tpu_custom_call.1} parent=5 // pred_check_branch
      %181 = sbr.rel (%p178) target = $region32
    $region31: #{tpu_custom_call.1} parent=5 // pred_region
      %s182 = ssub.s32 %s9, 1
      %p183 = scmp.lt.s32.totalorder %s19, 1
      %s184 = scalar_select %p183, %s19, 1
      %s185 = smul.addr %s184, 54
      %s186 = smul.addr %s185, 4
      %s187 = scalar_lea.vmem %s0, %s186
      %p188 = pneg %p54
      %p189 = pneg %p51
      %p190 = scmp.lt.s32.totalorder %s20, 0
      %s191 = scalar_select %p190, %s20, 0
      %s192 = smul.addr %s191, 4
      %s193 = scalar_lea.vmem %s1, %s192
      %p194 = pneg %p80
      %p195 = pneg %p77
      %p196 = scmp.lt.s32.totalorder %s20, 0
      %s197 = scalar_select %p196, %s20, 0
      %s198 = scalar_lea.vmem %s2, %s197
      %p199 = pneg %p106
      %p200 = pneg %p103
      %p201 = pneg %p136
      %p202 = pneg %p133
      %p203 = scmp.lt.s32.totalorder %s19, 1
      %s204 = scalar_select %p203, %s19, 1
      %p205 = scmp.lt.s32.totalorder %s21, 16
      %s206 = scalar_select %p205, %s21, 16
      %p207 = scmp.lt.s32.totalorder %s20, 0
      %s208 = scalar_select %p207, %s20, 0
      %s209 = smul.addr %s206, 3
      %s210 = sadd.s32 %s208, %s209
      %s211 = smul.addr %s204, 51
      %s212 = sadd.s32 %s210, %s211
      %s213 = smul.addr %s212, 4
      %s214 = scalar_lea.vmem %s3, %s213
      %p215 = scmp.lt.s32.totalorder %s19, 1
      %s216 = scalar_select %p215, %s19, 1
      %s217 = smul.addr %s216, 54
      %s218 = smul.addr %s217, 4
      %s219 = scalar_lea.vmem %s0, %s218
      %p220 = scmp.lt.s32.totalorder %s20, 0
      %s221 = scalar_select %p220, %s20, 0
      %s222 = smul.addr %s221, 4
      %s223 = scalar_lea.vmem %s1, %s222
      %p224 = scmp.lt.s32.totalorder %s20, 0
      %s225 = scalar_select %p224, %s20, 0
      %s226 = scalar_lea.vmem %s2, %s225
      %p227 = scmp.lt.s32.totalorder %s19, 1
      %s228 = scalar_select %p227, %s19, 1
      %p229 = scmp.lt.s32.totalorder %s21, 16
      %s230 = scalar_select %p229, %s21, 16
      %p231 = scmp.lt.s32.totalorder %s20, 0
      %s232 = scalar_select %p231, %s20, 0
      %s233 = smul.addr %s230, 3
      %s234 = sadd.s32 %s232, %s233
      %s235 = smul.addr %s228, 51
      %s236 = sadd.s32 %s234, %s235
      %s237 = smul.addr %s236, 4
      %s238 = scalar_lea.vmem %s3, %s237
      %s240 = smul.u32 %s21, 3
      %s241 = smul.addr %s240, 4
      %s242 = scalar_lea.vmem %s219, %s241
      %v243 = vld [vmem:[%s242] sm:$0xf]
      %v244 = vld [vmem:[%s242 + $0x4] sm:$0xf]
      %v245 = vld [vmem:[%s242 + $0x8] sm:$0x1]
      %v246 = vld [vmem:[%s223] sm:$0xf]
      %v247 = vld [vmem:[%s223 + $0x4] sm:$0x3]
      %s248 = scalar_lea.vmem %s223, 8
      %v249 = vld [vmem:[%s248] sm:$0xf]
      %v250 = vld [vmem:[%s248 + $0x4] sm:$0x3]
      %v254 = vunpack.c.l.b16 %v243
      %v255 = vunpack.c.l.b16 %v244
      %v256 = vunpack.c.l.b16 %v245
      %v257 = vpack.c.b16 %v255, %v254
      %v258 = vpack.c.b16 %v256, %v256
      %vm259 = vsmask.f32 7424
      %v261 = vshrl.u32 %v257, 16
      %v263 = vshll.u32 %v257, 16
      %v265 = vrot.slane %v263, 1
      %v266 = vor.u32 %v261, %v265
      %v268 = vshll.u32 %v258, 16
      %v270 = vrot.slane %v268, 1
      %v271 = vsel %vm259, %v266, %v270
      %v272 = vshrl.u32 %v258, 16
      %v276 = vunpack.c.l.b16 %v249
      %v277 = vunpack.c.l.b16 %v250
      %v278 = vpack.c.b16 %v277, %v276
      %vm279 = vcmask 97280
      %v281 = vsel %vm279, %v271, 0
      %v284 = vsel %vm279, %v272, 0
      %vm286 = vcmask 1045504
      %v288 = vsel %vm286, %v278, 0
      %290 = vmatpush.bf16.msra.mxu0 0
      %291 = vmatpush.bf16.msra.mxu0 0
      %292 = vmatpush.bf16.msra.mxu0 0
      %293 = vmatpush.bf16.msra.mxu0 0
      %294 = vmatpush.bf16.msra.mxu0 0
      %295 = vmatpush.bf16.msra.mxu0 0
      %296 = vmatpush.bf16.msra.mxu0 0
      %297 = vmatpush.bf16.msra.mxu0 %v288
      %298 = vmatmul.bf16.gmra.mxu0 %v281
      %v299 = vpop.f32.mrf.mxu0
      %v300 = vadd.f32 0.0, %v299
      %v301 = vpop.f32.mrf.mxu0
      %v302 = vadd.f32 0.0, %v301
      %303 = vmatmul.bf16.gmra.mxu0 %v284
      %v304 = vpop.f32.mrf.mxu0
      %v305 = vadd.f32 0.0, %v304
      %v306 = vpop.f32.mrf.mxu0
      %307 = vdwg.mxu0
      %v310 = vunpack.c.l.b16 %v246
      %v311 = vunpack.c.l.b16 %v247
      %v312 = vpack.c.b16 %v311, %v310
      %v313 = vsel %vm279, %v257, 0
      %v315 = vsel %vm279, %v258, 0
      %v318 = vsel %vm286, %v312, 0
      %320 = vmatpush.bf16.msra.mxu0 0
      %321 = vmatpush.bf16.msra.mxu0 0
      %322 = vmatpush.bf16.msra.mxu0 0
      %323 = vmatpush.bf16.msra.mxu0 0
      %324 = vmatpush.bf16.msra.mxu0 0
      %325 = vmatpush.bf16.msra.mxu0 0
      %326 = vmatpush.bf16.msra.mxu0 0
      %327 = vmatpush.bf16.msra.mxu0 %v318
      %328 = vmatmul.bf16.gmra.mxu0 %v313
      %v329 = vpop.f32.mrf.mxu0
      %v330 = vadd.f32 %v300, %v329
      %v331 = vpop.f32.mrf.mxu0
      %v332 = vadd.f32 %v302, %v331
      %333 = vmatmul.bf16.gmra.mxu0 %v315
      %v334 = vpop.f32.mrf.mxu0
      %v335 = vadd.f32 %v305, %v334
      %v336 = vpop.f32.mrf.mxu0
      %337 = vdwg.mxu0
      %s338 = sadd.s32 %s21, 1
      %s339 = smul.u32 %s338, 3
      %s340 = smul.addr %s339, 4
      %s341 = scalar_lea.vmem %s219, %s340
      %v342 = vld [vmem:[%s341] sm:$0xf]
      %v343 = vld [vmem:[%s341 + $0x4] sm:$0xf]
      %v344 = vld [vmem:[%s341 + $0x8] sm:$0x1]
      %s345 = scalar_lea.vmem %s223, 16
      %v346 = vld [vmem:[%s345] sm:$0xf]
      %v347 = vld [vmem:[%s345 + $0x4] sm:$0x3]
      %v351 = vunpack.c.l.b16 %v342
      %v352 = vunpack.c.l.b16 %v343
      %v353 = vunpack.c.l.b16 %v344
      %v354 = vpack.c.b16 %v352, %v351
      %v355 = vpack.c.b16 %v353, %v353
      %v358 = vunpack.c.l.b16 %v346
      %v359 = vunpack.c.l.b16 %v347
      %v360 = vpack.c.b16 %v359, %v358
      %v362 = vsel %vm279, %v354, 0
      %v365 = vsel %vm279, %v355, 0
      %v368 = vsel %vm286, %v360, 0
      %370 = vmatpush.bf16.msra.mxu0 0
      %371 = vmatpush.bf16.msra.mxu0 0
      %372 = vmatpush.bf16.msra.mxu0 0
      %373 = vmatpush.bf16.msra.mxu0 0
      %374 = vmatpush.bf16.msra.mxu0 0
      %375 = vmatpush.bf16.msra.mxu0 0
      %376 = vmatpush.bf16.msra.mxu0 0
      %377 = vmatpush.bf16.msra.mxu0 %v368
      %378 = vmatmul.bf16.gmra.mxu0 %v362
      %v379 = vpop.f32.mrf.mxu0
      %v380 = vadd.f32 0.0, %v379
      %v381 = vpop.f32.mrf.mxu0
      %v382 = vadd.f32 0.0, %v381
      %383 = vmatmul.bf16.gmra.mxu0 %v365
      %v384 = vpop.f32.mrf.mxu0
      %v385 = vadd.f32 0.0, %v384
      %v386 = vpop.f32.mrf.mxu0
      %387 = vdwg.mxu0
      %v388 = vadd.f32 %v330, %v380
      %v389 = vadd.f32 %v332, %v382
      %v390 = vadd.f32 %v335, %v385
      %s391 = scalar_lea.vmem %s223, 24
      %v392 = vld [vmem:[%s391] sm:$0xf]
      %v393 = vld [vmem:[%s391 + $0x4] sm:$0x3]
      %v394 = vshrl.u32 %v354, 16
      %v396 = vshll.u32 %v354, 16
      %v398 = vrot.slane %v396, 1
      %v399 = vor.u32 %v394, %v398
      %v400 = vshll.u32 %v355, 16
      %v402 = vrot.slane %v400, 1
      %v403 = vsel %vm259, %v399, %v402
      %v404 = vshrl.u32 %v355, 16
      %v408 = vunpack.c.l.b16 %v392
      %v409 = vunpack.c.l.b16 %v393
      %v410 = vpack.c.b16 %v409, %v408
      %v412 = vsel %vm279, %v403, 0
      %v415 = vsel %vm279, %v404, 0
      %v418 = vsel %vm286, %v410, 0
      %420 = vmatpush.bf16.msra.mxu0 0
      %421 = vmatpush.bf16.msra.mxu0 0
      %422 = vmatpush.bf16.msra.mxu0 0
      %423 = vmatpush.bf16.msra.mxu0 0
      %424 = vmatpush.bf16.msra.mxu0 0
      %425 = vmatpush.bf16.msra.mxu0 0
      %426 = vmatpush.bf16.msra.mxu0 0
      %427 = vmatpush.bf16.msra.mxu0 %v418
      %428 = vmatmul.bf16.gmra.mxu0 %v412
      %v429 = vpop.f32.mrf.mxu0
      %v430 = vadd.f32 0.0, %v429
      %v431 = vpop.f32.mrf.mxu0
      %v432 = vadd.f32 0.0, %v431
      %433 = vmatmul.bf16.gmra.mxu0 %v415
      %v434 = vpop.f32.mrf.mxu0
      %v435 = vadd.f32 0.0, %v434
      %v436 = vpop.f32.mrf.mxu0
      %437 = vdwg.mxu0
      %v438 = vadd.f32 %v388, %v430
      %v439 = vadd.f32 %v389, %v432
      %v440 = vadd.f32 %v390, %v435
      %v441 = vld [vmem:[%s226] sm:$0x1]
      %v443 = vperm.slane %v441, 0
      %v445 = vadd.f32 %v438, %v443
      %v446 = vadd.f32 %v439, %v443
      %v447 = vadd.f32 %v440, %v443
      %vm448 = vcmp.ge.f32.partialorder %v445, 0.0
      %vm449 = vcmp.ge.f32.partialorder %v446, 0.0
      %vm450 = vcmp.ge.f32.partialorder %v447, 0.0
      %v451 = vmul.f32 %v445, 0.2
      %v452 = vmul.f32 %v446, 0.2
      %v453 = vmul.f32 %v447, 0.2
      %v454 = vsel %vm448, %v445, %v451
      %v455 = vsel %vm449, %v446, %v452
      %v456 = vsel %vm450, %v447, %v453
      %v457 = vpack.c.bf16 %v454, %v454
      %v458 = vpack.c.bf16 %v455, %v455
      %v459 = vpack.c.bf16 %v456, %v456
      %vm460 = vcmask 60416
      %461 = vst.msk [vmem:[%s238] sm:$0xf] %vm460, %v457
      %462 = vst.msk [vmem:[%s238 + $0x4] sm:$0xf] %vm460, %v458
      %vm463 = vcmask 57344
      %vm464 = vsmask.f32 256
      %vm465 = vmand %vm463, %vm464
      %v466 = vld [vmem:[%s238 + $0x8] sm:$0x1]
      %v467 = vsel %vm465, %v459, %v466
      %468 = vst [vmem:[%s238 + $0x8] sm:$0x1] %v467
      %p469 = scmp.lt.s32.totalorder %s19, 1
      %s470 = scalar_select %p469, %s19, 1
      %p471 = scmp.lt.s32.totalorder %s21, 16
      %s472 = scalar_select %p471, %s21, 16
      %p473 = scmp.lt.s32.totalorder %s20, 0
      %s474 = scalar_select %p473, %s20, 0
      %s475 = smul.addr %s472, 3
      %s476 = sadd.s32 %s474, %s475
      %s477 = smul.addr %s470, 51
      %s478 = sadd.s32 %s476, %s477
      %s479 = smul.addr %s478, 4
      %s480 = scalar_lea.vmem %s3, %s479
      // Predicated region
      $region33: #{tpu_custom_call.1} parent=31 // pred_check
        %p481 = pneg %p133
      $region34: #{tpu_custom_call.1} parent=31 // pred_check_branch
        %483 = sbr.rel (%p481) target = $region36
      $region35: #{tpu_custom_call.1} parent=31 // pred_region
        _
      $region36: #{tpu_custom_call.1} parent=31 // pred_fallthru
        _
    $region32: #{tpu_custom_call.1} parent=5 // pred_fallthru
      _
    %p484 = scmp.le.s32.totalorder 2, %s9
    // Predicated region
    $region37: #{tpu_custom_call.1} parent=5 // pred_check
      %p485 = pneg %p484
    $region38: #{tpu_custom_call.1} parent=5 // pred_check_branch
      %487 = sbr.rel (%p485) target = $region40
    $region39: #{tpu_custom_call.1} parent=5 // pred_region
      %s488 = ssub.s32 %s9, 2
      // Predicated region
      $region41: #{tpu_custom_call.1} parent=39 // pred_check
        %p489 = pneg %p139
      $region42: #{tpu_custom_call.1} parent=39 // pred_check_branch
        %491 = sbr.rel (%p489) target = $region44
      $region43: #{tpu_custom_call.1} parent=39 // pred_region
        %p492 = scmp.lt.s32.totalorder %s22, 1
        %s493 = scalar_select %p492, %s22, 1
        %p494 = scmp.lt.s32.totalorder %s24, 16
        %s495 = scalar_select %p494, %s24, 16
        %p496 = scmp.lt.s32.totalorder %s23, 0
        %s497 = scalar_select %p496, %s23, 0
        %s498 = smul.addr %s495, 3
        %s499 = sadd.s32 %s497, %s498
        %s500 = smul.addr %s493, 51
        %s501 = sadd.s32 %s499, %s500
        %s502 = smul.addr %s501, 4
        %s503 = scalar_lea.vmem %s3, %s502
      $region44: #{tpu_custom_call.1} parent=39 // pred_fallthru
        _
    $region40: #{tpu_custom_call.1} parent=5 // pred_fallthru
      _
  $region6: #{tpu_custom_call.1} parent=0 // loop_footer
    %s13 = sadd.s32 1, %s9
  $region7: #{tpu_custom_call.1} parent=0 // loop_footer_branch
    %8 = sbr.rel target = $region3
  $region8: #{tpu_custom_call.1} parent=0 // loop_exit
    _

</llo_original>
